<compile_context>
chip_gen: v5e
topology: v5e:2x2
jax: 0.10.0
libtpu: 0.0.40
codegen_flags: <defaults>
</compile_context>

<pallas_src>
import functools

import jax
import jax.numpy as jnp
from jax.experimental import pallas as pl
from jax.experimental.pallas import tpu as pltpu

M_POSITIVE = 0.9
M_NEGATIVE = 0.1
LAMBDA_CONSTANT = 0.5
RECONSTRUCTION_ALPHA = 0.0005


def _margin_loss(lab, prob):
    lab = lab.astype(jnp.float32)
    prob = prob.astype(jnp.float32)
    pos = jnp.maximum(M_POSITIVE - prob, 0.0)
    neg = jnp.maximum(prob - M_NEGATIVE, 0.0)
    return jnp.sum(lab * pos * pos + LAMBDA_CONSTANT * (1.0 - lab) * neg * neg)


# ---------------------------------------------------------------------------
# Small-input fast path: everything in one VMEM block, no grid, no padding.
# ---------------------------------------------------------------------------
def _capsule_loss_small_kernel(img_ref, rec_ref, lab_ref, prob_ref, out_ref):
    diff = img_ref[...].astype(jnp.float32) - rec_ref[...].astype(jnp.float32)
    recon = jnp.sum(diff * diff)
    margin = _margin_loss(lab_ref[...], prob_ref[...])
    out_ref[...] = jnp.zeros_like(out_ref) + (margin + RECONSTRUCTION_ALPHA * recon)


# ---------------------------------------------------------------------------
# Streaming path: HBM-bound sum of squares over lane-dense (rows, lanes) slabs.
# ---------------------------------------------------------------------------
def _capsule_loss_stream_kernel(img_ref, rec_ref, lab_ref, prob_ref, out_ref,
                                acc_ref, *, tr, lanes, rows, needs_mask):
    i = pl.program_id(0)
    n = pl.num_programs(0)

    @pl.when(i == 0)
    def _init():
        acc_ref[...] = jnp.zeros_like(acc_ref)

    diff = img_ref[...].astype(jnp.float32) - rec_ref[...].astype(jnp.float32)

    if needs_mask:
        # Last tile may extend past the array; mask garbage rows (pure VPU).
        gid = jax.lax.broadcasted_iota(jnp.int32, (tr, lanes), 0) + i * tr
        diff = jnp.where(gid < rows, diff, 0.0)

    dsq = diff * diff

    # Fold the tile into a small accumulator.  Sublane-group fold lowers to plain
    # vreg adds (VPU); the single cross-lane reduce happens only at finalize.
    if tr % 8 == 0:
        acc_ref[...] += dsq.reshape(tr // 8, 8, lanes).sum(axis=0)
    else:
        # Only reachable in the single-tile (tr == rows, rows % 8 != 0) case.
        acc_ref[...] += dsq.sum(axis=0, keepdims=True)

    @pl.when(i == n - 1)
    def _finalize():
        margin = _margin_loss(lab_ref[...], prob_ref[...])
        recon = jnp.sum(acc_ref[...])
        out_ref[...] = jnp.zeros_like(out_ref) + (margin + RECONSTRUCTION_ALPHA * recon)


# ---------------------------------------------------------------------------
# Wrapper
# ---------------------------------------------------------------------------
def _pick_target_block_bytes():
    """2-4 MiB streaming blocks hit the measured HBM-roofline regime; keep
    2 streams x 2 pipeline buffers x block well inside scoped VMEM (v7x: 64 MiB)."""
    try:
        info = pltpu.get_tpu_info()
        vmem = int(getattr(info, "vmem_capacity_bytes", 128 * 1024 * 1024))
        return int(min(4 * 1024 * 1024, max(1 * 1024 * 1024, vmem // 32)))
    except Exception:
        return 2 * 1024 * 1024


def capsule_loss(images, reconstructions, labels, class_probabilities, *,
                 fast_path_max_elems=64 * 1024, target_block_bytes=None):
    """Pallas implementation of CapsuleLoss.forward.

    images: (B, C, H, W); reconstructions: (B, C*H*W); labels: (B, K) one-hot;
    class_probabilities: (B, K).  Returns a scalar float32.
    """
    assert images.size == reconstructions.size
    batch = reconstructions.shape[0]

    img_flat = images.reshape(-1)            # contiguous reshape: free
    rec_flat = reconstructions.reshape(-1)   # contiguous reshape: free
    total = int(img_flat.shape[0])

    # ---- small-input fast path -------------------------------------------------
    if total <= fast_path_max_elems:
        out = pl.pallas_call(
            _capsule_loss_small_kernel,
            out_shape=jax.ShapeDtypeStruct((8, 128), jnp.float32),
        )(img_flat.reshape(1, total), rec_flat.reshape(1, total),
          labels, class_probabilities)
        return out[0, 0] / jnp.float32(batch)

    # ---- streaming path --------------------------------------------------------
    if target_block_bytes is None:
        target_block_bytes = _pick_target_block_bytes()

    pad = (-total) % 128
    if pad:
        # TODO(synk): a fully copy-free ragged tail needs a manual 1-D DMA epilogue;
        # fall back to a zero pad (both streams padded identically -> diff == 0).
        img_flat = jnp.pad(img_flat, (0, pad))
        rec_flat = jnp.pad(rec_flat, (0, pad))
    padded_total = total + pad

    lanes = next(l for l in (1024, 512, 256, 128) if padded_total % l == 0)
    rows = padded_total // lanes

    itemsize = max(jnp.dtype(images.dtype).itemsize,
                   jnp.dtype(reconstructions.dtype).itemsize)
    tr_cap = max(16, (target_block_bytes // (lanes * itemsize)) // 16 * 16)
    if rows <= tr_cap:
        tr = rows          # single full-extent tile: no partial blocks, no mask
    else:
        tr = tr_cap        # multiple of 16; last tile may be partial (masked)
    num_tiles = -(-rows // tr)
    needs_mask = (rows % tr) != 0
    acc_rows = 8 if tr % 8 == 0 else 1

    img2d = img_flat.reshape(rows, lanes)    # contiguous reshape: free
    rec2d = rec_flat.reshape(rows, lanes)

    kernel = functools.partial(_capsule_loss_stream_kernel,
                               tr=tr, lanes=lanes, rows=rows,
                               needs_mask=needs_mask)

    cost = pl.CostEstimate(
        flops=3 * padded_total + 8 * labels.size,
        transcendentals=0,
        bytes_accessed=(img2d.size * img2d.dtype.itemsize
                        + rec2d.size * rec2d.dtype.itemsize
                        + labels.size * labels.dtype.itemsize
                        + class_probabilities.size * class_probabilities.dtype.itemsize
                        + 8 * 128 * 4),
    )

    # TODO(synk): on v7x, shard the tile axis across the 2 TensorCores
    # (CORE_PARALLEL / pl.core_map) with per-core partial outputs; on v5e/v6e a
    # single "arbitrary" reduction axis is optimal.
    out = pl.pallas_call(
        kernel,
        out_shape=jax.ShapeDtypeStruct((8, 128), jnp.float32),
        grid_spec=pltpu.PrefetchScalarGridSpec(
            num_scalar_prefetch=0,
            grid=(num_tiles,),
            in_specs=[
                pl.BlockSpec((tr, lanes), lambda i: (i, 0)),
                pl.BlockSpec((tr, lanes), lambda i: (i, 0)),
                pl.BlockSpec(labels.shape, lambda i: (0, 0)),             # resident, tiny
                pl.BlockSpec(class_probabilities.shape, lambda i: (0, 0)),  # resident, tiny
            ],
            out_specs=pl.BlockSpec((8, 128), lambda i: (0, 0)),
            scratch_shapes=[pltpu.VMEM((acc_rows, lanes), jnp.float32)],
        ),
        compiler_params=pltpu.CompilerParams(
            dimension_semantics=("arbitrary",),
            vmem_limit_bytes=32 * 1024 * 1024,
        ),
        cost_estimate=cost,
    )(img2d, rec2d, labels, class_probabilities)

    return out[0, 0] / jnp.float32(batch)


# ---------------------------------------------------------------------------
# Pure-JAX reference (mirrors the PyTorch module exactly)
# ---------------------------------------------------------------------------
def _reference_loss(images, reconstructions, labels, class_probabilities):
    batch = reconstructions.shape[0]
    img = images.reshape(batch, -1).astype(jnp.float32)
    rec = reconstructions.astype(jnp.float32)
    lab = labels.astype(jnp.float32)
    p = class_probabilities.astype(jnp.float32)
    margin = jnp.sum(lab * jnp.maximum(M_POSITIVE - p, 0.0) ** 2
                     + LAMBDA_CONSTANT * (1.0 - lab) * jnp.maximum(p - M_NEGATIVE, 0.0) ** 2)
    recon = jnp.sum((img - rec) ** 2)
    return (margin + RECONSTRUCTION_ALPHA * recon) / batch


if __name__ == "__main__":
    key = jax.random.PRNGKey(0)

    def make_inputs(k, B, C, H, W, K=10, dtype=jnp.float32):
        k1, k2, k3, k4 = jax.random.split(k, 4)
        images = jax.random.uniform(k1, (B, C, H, W), dtype=dtype)
        reconstructions = jax.random.uniform(k2, (B, C * H * W), dtype=dtype)
        class_idx = jax.random.randint(k3, (B,), 0, K)
        labels = jax.nn.one_hot(class_idx, K, dtype=dtype)
        class_probabilities = jax.random.uniform(k4, (B, K), dtype=dtype)
        return images, reconstructions, labels, class_probabilities

    def check(args, **kw):
        got = jax.block_until_ready(capsule_loss(*args, **kw))
        want = _reference_loss(*args)
        assert jnp.allclose(got, want, rtol=1e-5, atol=1e-5), (got, want, kw)

    k0, k1, k2 = jax.random.split(key, 3)

    # 1) Primary small case (B=2, C=4, H=W=16): single-block fast path.
    args_small = make_inputs(k0, 2, 4, 16, 16)
    check(args_small)

    # 2) Same inputs forced through the streaming path (single full-extent tile).
    check(args_small, fast_path_max_elems=0)

    # 3) Streaming path where total is not a multiple of 128 (zero-pad fallback).
    args_att = make_inputs(k1, 3, 1, 112, 92)
    check(args_att, fast_path_max_elems=0)

    # 4) Streaming path, multi-tile with a masked partial last tile.
    args_mid = make_inputs(k2, 2, 1, 96, 96)
    check(args_mid, fast_path_max_elems=0, target_block_bytes=16 * 1024)

    print("KERNEL_OK")
</pallas_src>

<mosaic_0001>
module attributes {stable_mosaic.version = 11 : i64} {
  func.func @_capsule_loss_small_kernel(%arg0: memref<1x2048xf32, #tpu.memory_space<vmem>>, %arg1: memref<1x2048xf32, #tpu.memory_space<vmem>>, %arg2: memref<2x10xf32, #tpu.memory_space<vmem>>, %arg3: memref<2x10xf32, #tpu.memory_space<vmem>>, %arg4: memref<8x128xf32, #tpu.memory_space<vmem>>) attributes {dimension_semantics = [], scalar_prefetch = 0 : i64, scratch_operands = 0 : i64, tpu.core_type = #tpu.core_type<tc>} {
    %c0 = arith.constant 0 : index
    %c0_0 = arith.constant 0 : index
    %0 = vector.load %arg0[%c0, %c0_0] : memref<1x2048xf32, #tpu.memory_space<vmem>>, vector<1x2048xf32>
    %c0_1 = arith.constant 0 : index
    %c0_2 = arith.constant 0 : index
    %1 = vector.load %arg1[%c0_1, %c0_2] : memref<1x2048xf32, #tpu.memory_space<vmem>>, vector<1x2048xf32>
    %2 = arith.subf %0, %1 : vector<1x2048xf32>
    %3 = arith.mulf %2, %2 : vector<1x2048xf32>
    %4 = vector.shape_cast %3 : vector<1x2048xf32> to vector<1x1x2048xf32>
    %cst = arith.constant dense<0.000000e+00> : vector<1xf32>
    %5 = vector.multi_reduction <add>, %4, %cst [1, 2] : vector<1x1x2048xf32> to vector<1xf32>
    %6 = vector.shape_cast %5 : vector<1xf32> to vector<1x1x1xf32>
    %7 = vector.extract %6[0, 0, 0] : f32 from vector<1x1x1xf32>
    %c0_3 = arith.constant 0 : index
    %c0_4 = arith.constant 0 : index
    %8 = vector.load %arg2[%c0_3, %c0_4] : memref<2x10xf32, #tpu.memory_space<vmem>>, vector<2x10xf32>
    %c0_5 = arith.constant 0 : index
    %c0_6 = arith.constant 0 : index
    %9 = vector.load %arg3[%c0_5, %c0_6] : memref<2x10xf32, #tpu.memory_space<vmem>>, vector<2x10xf32>
    %cst_7 = arith.constant 0.899999976 : f32
    %10 = vector.broadcast %cst_7 : f32 to vector<2x10xf32>
    %11 = arith.subf %10, %9 : vector<2x10xf32>
    %cst_8 = arith.constant 0.000000e+00 : f32
    %12 = vector.broadcast %cst_8 : f32 to vector<2x10xf32>
    %13 = arith.maximumf %11, %12 : vector<2x10xf32>
    %cst_9 = arith.constant 1.000000e-01 : f32
    %14 = vector.broadcast %cst_9 : f32 to vector<2x10xf32>
    %15 = arith.subf %9, %14 : vector<2x10xf32>
    %cst_10 = arith.constant 0.000000e+00 : f32
    %16 = vector.broadcast %cst_10 : f32 to vector<2x10xf32>
    %17 = arith.maximumf %15, %16 : vector<2x10xf32>
    %18 = arith.mulf %8, %13 : vector<2x10xf32>
    %19 = arith.mulf %18, %13 : vector<2x10xf32>
    %cst_11 = arith.constant 1.000000e+00 : f32
    %20 = vector.broadcast %cst_11 : f32 to vector<2x10xf32>
    %21 = arith.subf %20, %8 : vector<2x10xf32>
    %cst_12 = arith.constant 5.000000e-01 : f32
    %22 = vector.broadcast %cst_12 : f32 to vector<2x10xf32>
    %23 = arith.mulf %22, %21 : vector<2x10xf32>
    %24 = arith.mulf %23, %17 : vector<2x10xf32>
    %25 = arith.mulf %24, %17 : vector<2x10xf32>
    %26 = arith.addf %19, %25 : vector<2x10xf32>
    %27 = vector.shape_cast %26 : vector<2x10xf32> to vector<1x2x10xf32>
    %cst_13 = arith.constant dense<0.000000e+00> : vector<1xf32>
    %28 = vector.multi_reduction <add>, %27, %cst_13 [1, 2] : vector<1x2x10xf32> to vector<1xf32>
    %29 = vector.shape_cast %28 : vector<1xf32> to vector<1x1x1xf32>
    %30 = vector.extract %29[0, 0, 0] : f32 from vector<1x1x1xf32>
    %cst_14 = arith.constant 0.000000e+00 : f32
    %31 = vector.broadcast %cst_14 : f32 to vector<8x128xf32>
    %cst_15 = arith.constant 5.000000e-04 : f32
    %32 = arith.mulf %cst_15, %7 : f32
    %33 = arith.addf %30, %32 : f32
    %34 = vector.broadcast %33 : f32 to vector<8x128xf32>
    %35 = arith.addf %31, %34 : vector<8x128xf32>
    %c0_16 = arith.constant 0 : index
    %c0_17 = arith.constant 0 : index
    %36 = vector.load %arg4[%c0_16, %c0_17] : memref<8x128xf32, #tpu.memory_space<vmem>>, vector<8x128xf32>
    tpu.vector_store %arg4[%c0_16, %c0_17], %35 {strides = array<i32>} : memref<8x128xf32, #tpu.memory_space<vmem>>, vector<8x128xf32>,
    return
  }
}

</mosaic_0001>

<llo_original>
// kernel: tpu_custom_call.1
$region0: #{tpu_custom_call.1}
  #allocation0 [shape = 'u32[]', space=smem, size = 0x4, offset = 0x4, fixed_abs, tag = 'smem constant byte address 0x4 - core index']
  #allocation1 [shape = 'u32[72,128]{1,0:T(1,128)}', space=vmem, size = 0x9000, scoped, tag = 'internal scratch']
  %s0 = inlined_call_operand.hbm [shape: f32[1,2048], index: 0, kind: input, shape index: {}]
  %s1 = inlined_call_operand.hbm [shape: f32[1,2048], index: 1, kind: input, shape index: {}]
  %s2 = inlined_call_operand.hbm [shape: f32[2,10], index: 2, kind: input, shape index: {}]
  %s3 = inlined_call_operand.vmem [shape: f32[2,10], index: 3, kind: input, shape index: {}]
  %s4 = inlined_call_operand.hbm [shape: f32[8,128], index: 4, kind: output, shape index: {}]
  %s5 = sld [smem:[#allocation0]]
  $region38: #{tpu_custom_call.1} parent=0
    _
  %s7 = ssub.s32 1, %s5
  %s8 = scalar_select 0, %s7, %s5
  $region1: #{tpu_custom_call.1} parent=0
    #allocation2 [shape = 'u8[8192]{0}', space=vmem, size = 0x2000, scoped, tag = 'input window, operand 0, single buffered']
    #allocation3 [shape = 's32[1]{0}', space=sflag, size = 0x4, scoped, tag = 'scoped memory for tpu_custom_call.1']
    #allocation4 [shape = 's32[1]{0}', space=sflag, size = 0x4, scoped, tag = 'scoped memory for tpu_custom_call.1']
    #allocation5 [shape = 'u8[8192]{0}', space=vmem, size = 0x2000, scoped, tag = 'input window, operand 1, single buffered']
    #allocation6 [shape = 's32[1]{0}', space=sflag, size = 0x4, scoped, tag = 'scoped memory for tpu_custom_call.1']
    #allocation7 [shape = 'u8[1024]{0}', space=vmem, size = 0x400, scoped, tag = 'input window, operand 2, single buffered']
    #allocation8 [shape = 'u8[4096]{0}', space=vmem, size = 0x1000, scoped, tag = 'output window, operand 0, single buffered']
    %9 = vsyncpa [#allocation3], 0
    %10 = vsyncpa [#allocation6], 0
    %11 = vsyncpa [#allocation4], 0
    // Predicated region
    $region2: #{tpu_custom_call.1} parent=1 // pred_check
      _
    $region3: #{tpu_custom_call.1} parent=1 // pred_check_branch
      %13 = sbr.rel (0) target = $region5
    $region4: #{tpu_custom_call.1} parent=1 // pred_region
      %15 = vsyncadd [#allocation3], 0
      %s17 = sshll.u32 %s0, 4
      %s18 = int_to_ptr.hbm [resolvable:$true] %s17
      %s19 = sshll.u32 [#allocation2], 4
      %s20 = int_to_ptr.vmem [resolvable:$true] %s19
      %22 = dma.hbm_to_vmem [thread:$0]  %s18, 256, %s20, [#allocation3]
    $region5: #{tpu_custom_call.1} parent=1 // pred_fallthru
      _
    // Predicated region
    $region6: #{tpu_custom_call.1} parent=1 // pred_check
      _
    $region7: #{tpu_custom_call.1} parent=1 // pred_check_branch
      %24 = sbr.rel (0) target = $region9
    $region8: #{tpu_custom_call.1} parent=1 // pred_region
      %26 = vsyncadd [#allocation6], 0
      %s28 = sshll.u32 %s1, 4
      %s29 = int_to_ptr.hbm [resolvable:$true] %s28
      %s30 = sshll.u32 [#allocation5], 4
      %s31 = int_to_ptr.vmem [resolvable:$true] %s30
      %33 = dma.hbm_to_vmem [thread:$0]  %s29, 256, %s31, [#allocation6]
    $region9: #{tpu_custom_call.1} parent=1 // pred_fallthru
      _
    // Predicated region
    $region10: #{tpu_custom_call.1} parent=1 // pred_check
      _
    $region11: #{tpu_custom_call.1} parent=1 // pred_check_branch
      %35 = sbr.rel (0) target = $region13
    $region12: #{tpu_custom_call.1} parent=1 // pred_region
      %37 = vsyncadd [#allocation6], 0
      %s39 = sshll.u32 %s2, 4
      %s40 = int_to_ptr.hbm [resolvable:$true] %s39
      %s41 = sshll.u32 [#allocation7], 4
      %s42 = int_to_ptr.vmem [resolvable:$true] %s41
      %44 = dma.hbm_to_vmem [thread:$0]  %s40, 32, %s42, [#allocation6]
    $region13: #{tpu_custom_call.1} parent=1 // pred_fallthru
      _
    // Predicated region
    $region14: #{tpu_custom_call.1} parent=1 // pred_check
      _
    $region15: #{tpu_custom_call.1} parent=1 // pred_check_branch
      %46 = sbr.rel (0) target = $region17
    $region16: #{tpu_custom_call.1} parent=1 // pred_region
      _
    $region17: #{tpu_custom_call.1} parent=1 // pred_fallthru
      _
    // Predicated region
    $region18: #{tpu_custom_call.1} parent=1 // pred_check
      _
    $region19: #{tpu_custom_call.1} parent=1 // pred_check_branch
      %48 = sbr.rel (0) target = $region21
    $region20: #{tpu_custom_call.1} parent=1 // pred_region
      %50 = dma.done [#allocation3], 256
    $region21: #{tpu_custom_call.1} parent=1 // pred_fallthru
      _
    // Predicated region
    $region22: #{tpu_custom_call.1} parent=1 // pred_check
      _
    $region23: #{tpu_custom_call.1} parent=1 // pred_check_branch
      %52 = sbr.rel (0) target = $region25
    $region24: #{tpu_custom_call.1} parent=1 // pred_region
      %54 = dma.done [#allocation6], 256
    $region25: #{tpu_custom_call.1} parent=1 // pred_fallthru
      _
    // Predicated region
    $region26: #{tpu_custom_call.1} parent=1 // pred_check
      _
    $region27: #{tpu_custom_call.1} parent=1 // pred_check_branch
      %56 = sbr.rel (0) target = $region29
    $region28: #{tpu_custom_call.1} parent=1 // pred_region
      %58 = dma.done [#allocation6], 32
    $region29: #{tpu_custom_call.1} parent=1 // pred_fallthru
      _
    %v59 = vld [vmem:[#allocation2] sm:$0xff]
    %v60 = vld [vmem:[#allocation2 + $0x8] sm:$0xff]
    %v61 = vld [vmem:[#allocation5] sm:$0xff]
    %v62 = vld [vmem:[#allocation5 + $0x8] sm:$0xff]
    %v63 = vsub.f32 %v59, %v61
    %v64 = vsub.f32 %v60, %v62
    %v65 = vmul.f32 %v63, %v63
    %v66 = vmul.f32 %v64, %v64
    %v69 = vperm.slane %v65, 0
    %v70 = vperm.slane %v65, 1
    %v71 = vperm.slane %v65, 2
    %v72 = vperm.slane %v65, 3
    %v73 = vperm.slane %v65, 4
    %v74 = vperm.slane %v65, 5
    %v75 = vperm.slane %v65, 6
    %v76 = vperm.slane %v65, 7
    %v77 = vperm.slane %v66, 0
    %v78 = vperm.slane %v66, 1
    %v79 = vperm.slane %v66, 2
    %v80 = vperm.slane %v66, 3
    %v81 = vperm.slane %v66, 4
    %v82 = vperm.slane %v66, 5
    %v83 = vperm.slane %v66, 6
    %v84 = vperm.slane %v66, 7
    %vm101 = vcmask 1040384
    %v102 = vsel %vm101, %v69, 0.0
    %v103 = vsel %vm101, %v70, 0.0
    %v104 = vadd.f32 %v102, %v103
    %v105 = vsel %vm101, %v71, 0.0
    %v106 = vadd.f32 %v104, %v105
    %v107 = vsel %vm101, %v72, 0.0
    %v108 = vadd.f32 %v106, %v107
    %v109 = vsel %vm101, %v73, 0.0
    %v110 = vadd.f32 %v108, %v109
    %v111 = vsel %vm101, %v74, 0.0
    %v112 = vadd.f32 %v110, %v111
    %v113 = vsel %vm101, %v75, 0.0
    %v114 = vadd.f32 %v112, %v113
    %v115 = vsel %vm101, %v76, 0.0
    %v116 = vadd.f32 %v114, %v115
    %v117 = vsel %vm101, %v77, 0.0
    %v118 = vadd.f32 %v116, %v117
    %v119 = vsel %vm101, %v78, 0.0
    %v120 = vadd.f32 %v118, %v119
    %v121 = vsel %vm101, %v79, 0.0
    %v122 = vadd.f32 %v120, %v121
    %v123 = vsel %vm101, %v80, 0.0
    %v124 = vadd.f32 %v122, %v123
    %v125 = vsel %vm101, %v81, 0.0
    %v126 = vadd.f32 %v124, %v125
    %v127 = vsel %vm101, %v82, 0.0
    %v128 = vadd.f32 %v126, %v127
    %v129 = vsel %vm101, %v83, 0.0
    %v130 = vadd.f32 %v128, %v129
    %v131 = vsel %vm101, %v84, 0.0
    %v132 = vadd.f32 %v130, %v131
    %133 = vadd.xlane.f32.xlu0 %v132
    %v134 = vpop.xlane.xlu0 %133
    %v135 = vrot.slane %v134, 4
    %v136 = vadd.f32 %v134, %v135
    %v137 = vrot.slane %v136, 2
    %v138 = vadd.f32 %v136, %v137
    %v139 = vrot.slane %v138, 1
    %v140 = vadd.f32 %v138, %v139
    %s141 = vtos %v140
    %v142 = vld [vmem:[#allocation7] sm:$0x3]
    %v143 = vld [vmem:[%s3] sm:$0x3]
    %v144 = vsub.f32 0.9, %v143
    %v145 = vmax.f32 %v144, 0.0
    %v146 = vsub.f32 %v143, 0.1
    %v147 = vmax.f32 %v146, 0.0
    %v148 = vmul.f32 %v142, %v145
    %v149 = vmul.f32 %v148, %v145
    %v150 = vsub.f32 1.0, %v142
    %v151 = vmul.f32 %v150, 0.5
    %v152 = vmul.f32 %v151, %v147
    %v153 = vmul.f32 %v152, %v147
    %v154 = vadd.f32 %v149, %v153
    %vm155 = vcmask 74752
    %v156 = vsel %vm155, %v154, 0.0
    %157 = vadd.xlane.f32.xlu0 %v156
    %v158 = vpop.xlane.xlu0 %157
    %v159 = vrot.slane %v158, 4
    %v160 = vadd.f32 %v158, %v159
    %v161 = vrot.slane %v160, 2
    %v162 = vadd.f32 %v160, %v161
    %v163 = vrot.slane %v162, 1
    %v164 = vadd.f32 %v162, %v163
    %s165 = vtos %v164
    %s166 = smul.f32 %s141, 0.0005
    %s167 = sadd.f32 %s165, %s166
    %v168 = vstv %s167
    %v169 = vadd.f32 %v168, 0.0
    %170 = vst [vmem:[#allocation8] sm:$0xff] %v169
    // Predicated region
    $region30: #{tpu_custom_call.1} parent=1 // pred_check
      _
    $region31: #{tpu_custom_call.1} parent=1 // pred_check_branch
      %172 = sbr.rel (0) target = $region33
    $region32: #{tpu_custom_call.1} parent=1 // pred_region
      %174 = vsyncadd [#allocation4], 0
      %s176 = sshll.u32 [#allocation8], 4
      %s177 = int_to_ptr.vmem [resolvable:$true] %s176
      %s178 = sshll.u32 %s4, 4
      %s179 = int_to_ptr.hbm [resolvable:$true] %s178
      %181 = dma.vmem_to_hbm [thread:$0]  %s177, 128, %s179, [#allocation4]
    $region33: #{tpu_custom_call.1} parent=1 // pred_fallthru
      _
    // Predicated region
    $region34: #{tpu_custom_call.1} parent=1 // pred_check
      _
    $region35: #{tpu_custom_call.1} parent=1 // pred_check_branch
      %183 = sbr.rel (0) target = $region37
    $region36: #{tpu_custom_call.1} parent=1 // pred_region
      %185 = dma.done [#allocation4], 128
    $region37: #{tpu_custom_call.1} parent=1 // pred_fallthru
      _
    %186 = vsyncpa [#allocation3], 1
    %187 = vsyncpa [#allocation6], 1
    %188 = vsyncpa [#allocation4], 1

</llo_original>
